<compile_context>
chip_gen: v7x
topology: tpu7x:2x2x1
jax: 0.10.0
libtpu: 0.0.40
codegen_flags: <defaults>
</compile_context>

<pallas_src>
import functools

import jax
import jax.numpy as jnp
from jax.experimental import pallas as pl
from jax.experimental.pallas import tpu as pltpu


_SQRT_2_OVER_PI = 0.7978845608028654


def _gelu(x):
    # tanh-approximate GELU (see TODO above).
    return 0.5 * x * (1.0 + jnp.tanh(_SQRT_2_OVER_PI * (x + 0.044715 * x * x * x)))


def _round_up(v, m):
    return ((v + m - 1) // m) * m


def _pad_to(x, shape):
    x = jnp.asarray(x, jnp.float32)
    pads = [(0, t - s) for s, t in zip(x.shape, shape)]
    return jnp.pad(x, pads)


# ---------------------------------------------------------------------------
# Kernel
# ---------------------------------------------------------------------------
def dmpnn_kernel(nodes_ref, edges_ref, src_ref, dst_ref,
                 w1ij_ref, w1e_ref, b1_ref,
                 w2_ref, b2_ref,
                 w3_ref, b3_ref,
                 w4_ref, b4_ref,
                 out_ref, *, use_residual=True):
    nodes = nodes_ref[...]                    # [Np, Dp]   f32 (zero padded)
    edges = edges_ref[...]                    # [Ep, Dep]  f32 (zero padded)
    num_edges = edges.shape[0]
    num_nodes = nodes.shape[0]
    hmp = w1e_ref.shape[1]                    # padded hidden message size

    nodes_bf = nodes.astype(jnp.bfloat16)

    # --- project-then-gather: layer-1 node projections, once per node -------
    # [Np, 2*Hmp] = nodes @ [W1i.T | W1j.T]   (256-wide output fills the MXU)
    p_both = jnp.dot(nodes_bf, w1ij_ref[...], preferred_element_type=jnp.float32)
    p_i = p_both[:, :hmp].astype(jnp.bfloat16)      # sender projection
    p_j = p_both[:, hmp:].astype(jnp.bfloat16)      # receiver projection

    # per-edge layer-1 contribution of the edge features (+ bias)
    pe = jnp.dot(edges.astype(jnp.bfloat16), w1e_ref[...],
                 preferred_element_type=jnp.float32) + b1_ref[...]   # [Ep, Hmp]

    # --- one-hot gather matrices (single iota, compare straight to bf16) ----
    node_ids = jax.lax.broadcasted_iota(jnp.int32, (num_edges, num_nodes), 1)
    onehot_src = (node_ids == src_ref[...]).astype(jnp.bfloat16)     # [Ep, Np]
    onehot_dst = (node_ids == dst_ref[...]).astype(jnp.bfloat16)     # [Ep, Np]
    # Padded edges carry index -1 -> all-zero one-hot rows (gather 0 / drop).

    # --- message MLP ---------------------------------------------------------
    h = (jnp.dot(onehot_src, p_i, preferred_element_type=jnp.float32)
         + jnp.dot(onehot_dst, p_j, preferred_element_type=jnp.float32)
         + pe)
    h = _gelu(h)                                                     # [Ep, Hmp]
    messages = _gelu(jnp.dot(h.astype(jnp.bfloat16), w2_ref[...],
                             preferred_element_type=jnp.float32) + b2_ref[...])  # [Ep, Dp]

    # --- scatter-add to receivers: boxes = onehot_dst^T @ messages ----------
    boxes = jax.lax.dot_general(
        onehot_dst, messages.astype(jnp.bfloat16),
        dimension_numbers=(((0,), (0,)), ((), ())),
        preferred_element_type=jnp.float32)                          # [Np, Dp]

    # --- combination MLP (single 256-deep contraction) -----------------------
    comb_in = jnp.concatenate([nodes_bf, boxes.astype(jnp.bfloat16)], axis=1)  # [Np, 2*Dp]
    hc = _gelu(jnp.dot(comb_in, w3_ref[...],
                       preferred_element_type=jnp.float32) + b3_ref[...])      # [Np, Hcp]
    combined = _gelu(jnp.dot(hc.astype(jnp.bfloat16), w4_ref[...],
                             preferred_element_type=jnp.float32) + b4_ref[...])  # [Np, Dp]

    if use_residual:
        combined = combined + nodes
    out_ref[...] = combined.astype(out_ref.dtype)


# ---------------------------------------------------------------------------
# One-time parameter preparation (hoisted out of the per-call path)
# ---------------------------------------------------------------------------
def prepare_params(params, node_size, edge_size, lane=128,
                   weight_dtype=jnp.bfloat16):
    """Split, transpose to (in, out), stack, zero-pad to lane-dense dims and
    cast the matmul weights to bf16 (f32 accumulation in-kernel).  Once per
    model."""
    W1, b1, W2, b2, W3, b3, W4, b4 = [jnp.asarray(p, jnp.float32) for p in params]
    D, De = node_size, edge_size
    Hm, Hc = W1.shape[0], W3.shape[0]
    Dp, Dep = _round_up(D, lane), _round_up(De, lane)
    Hmp, Hcp = _round_up(Hm, lane), _round_up(Hc, lane)

    w1i_t = _pad_to(W1[:, :D].T, (Dp, Hmp))
    w1j_t = _pad_to(W1[:, D:2 * D].T, (Dp, Hmp))
    w1ij_t = jnp.concatenate([w1i_t, w1j_t], axis=1)        # [Dp, 2*Hmp]

    w3x_t = _pad_to(W3[:, :D].T, (Dp, Hcp))
    w3m_t = _pad_to(W3[:, D:].T, (Dp, Hcp))
    w3_t = jnp.concatenate([w3x_t, w3m_t], axis=0)          # [2*Dp, Hcp]

    return dict(
        w1ij_t=w1ij_t.astype(weight_dtype),
        w1e_t=_pad_to(W1[:, 2 * D:].T, (Dep, Hmp)).astype(weight_dtype),
        b1=_pad_to(b1.reshape(1, Hm), (1, Hmp)),
        w2_t=_pad_to(W2.T, (Hmp, Dp)).astype(weight_dtype),
        b2=_pad_to(b2.reshape(1, D), (1, Dp)),
        w3_t=w3_t.astype(weight_dtype),
        b3=_pad_to(b3.reshape(1, Hc), (1, Hcp)),
        w4_t=_pad_to(W4.T, (Hcp, Dp)).astype(weight_dtype),
        b4=_pad_to(b4.reshape(1, D), (1, Dp)),
    )


# ---------------------------------------------------------------------------
# Forward wrapper
# ---------------------------------------------------------------------------
def dmpnn_forward(node_vectors, edge_vectors, edge_indices, prepared,
                  *, use_residual=True):
    N, D = node_vectors.shape
    E, _ = edge_vectors.shape
    Dp = prepared["w2_t"].shape[1]
    Dep = prepared["w1e_t"].shape[0]
    Hmp = prepared["w1e_t"].shape[1]
    Hcp = prepared["w3_t"].shape[1]

    # Row padding: multiples of 16 so bf16 sublane packing is clean.
    Np = _round_up(max(N, 1), 16)
    Ep = _round_up(max(E, 1), 16)

    nodes_p = _pad_to(node_vectors, (Np, Dp))
    edges_p = _pad_to(edge_vectors, (Ep, Dep))
    src = edge_indices[:, 0].astype(jnp.int32)
    dst = edge_indices[:, 1].astype(jnp.int32)
    # Padded edges get index -1: never matches a node id -> gather zeros and
    # the scatter drops their (nonzero) messages.
    src_col = jnp.pad(src, (0, Ep - E), constant_values=-1).reshape(Ep, 1)
    dst_col = jnp.pad(dst, (0, Ep - E), constant_values=-1).reshape(Ep, 1)

    operands = (nodes_p, edges_p, src_col, dst_col,
                prepared["w1ij_t"], prepared["w1e_t"], prepared["b1"],
                prepared["w2_t"], prepared["b2"],
                prepared["w3_t"], prepared["b3"],
                prepared["w4_t"], prepared["b4"])

    # Advisory cost estimate (project-then-gather accounting).
    flops = (2 * Np * Dp * (2 * Hmp)            # layer-1 node projection (per node)
             + 2 * Ep * Dep * Hmp               # layer-1 edge projection
             + 2 * 2 * Ep * Np * Hmp            # one-hot gathers of p_i / p_j
             + 2 * Ep * Hmp * Dp                # message layer 2
             + 2 * Ep * Np * Dp                 # scatter-add (onehot^T @ messages)
             + 2 * Np * (2 * Dp) * Hcp          # combination layer 1
             + 2 * Np * Hcp * Dp)               # combination layer 2
    transcendentals = Ep * Hmp + Ep * Dp + Np * Hcp + Np * Dp
    operand_bytes = sum(int(op.size) * op.dtype.itemsize for op in operands)
    onehot_bytes = 2 * Ep * Np * 2              # two bf16 [Ep, Np] one-hots
    bytes_accessed = operand_bytes + Np * Dp * 4 + onehot_bytes

    # Scoped VMEM: size to the real footprint, capped below v7x's 64 MiB.
    act_bytes = 4 * (Np * 2 * Hmp + 2 * Ep * Hmp + Ep * Dp + 3 * Np * Dp + Np * 2 * Dp)
    est = operand_bytes + onehot_bytes + act_bytes + Np * Dp * 4
    vmem_limit = int(min(max(32 * 2**20, 2 * est + (4 << 20)), 56 * 2**20))

    vmem_spec = pl.BlockSpec(memory_space=pltpu.MemorySpace.VMEM)

    out_p = pl.pallas_call(
        functools.partial(dmpnn_kernel, use_residual=use_residual),
        out_shape=jax.ShapeDtypeStruct((Np, Dp), jnp.float32),
        in_specs=[vmem_spec] * len(operands),
        out_specs=vmem_spec,
        compiler_params=pltpu.CompilerParams(vmem_limit_bytes=vmem_limit),
        cost_estimate=pl.CostEstimate(flops=flops,
                                      transcendentals=transcendentals,
                                      bytes_accessed=bytes_accessed),
    )(*operands)

    return out_p[:N, :D]


# ---------------------------------------------------------------------------
# Pure-JAX f32 reference of the PyTorch module (same tanh-GELU as the kernel)
# ---------------------------------------------------------------------------
def dmpnn_reference(nodes, edges, edge_indices, params, use_residual=True):
    W1, b1, W2, b2, W3, b3, W4, b4 = params
    hi = jax.lax.Precision.HIGHEST
    node_i = nodes[edge_indices[:, 0]]
    node_j = nodes[edge_indices[:, 1]]
    msg_in = jnp.concatenate([node_i, node_j, edges], axis=1)
    h = _gelu(jnp.dot(msg_in, W1.T, precision=hi) + b1)
    messages = _gelu(jnp.dot(h, W2.T, precision=hi) + b2)
    boxes = jnp.zeros_like(nodes).at[edge_indices[:, 1]].add(messages)
    comb_in = jnp.concatenate([nodes, boxes], axis=1)
    hc = _gelu(jnp.dot(comb_in, W3.T, precision=hi) + b3)
    combined = _gelu(jnp.dot(hc, W4.T, precision=hi) + b4)
    return nodes + combined if use_residual else combined


def init_linear(key, in_features, out_features, dtype=jnp.float32):
    """torch.nn.Linear default init: U(-1/sqrt(fan_in), 1/sqrt(fan_in))."""
    k_w, k_b = jax.random.split(key)
    bound = 1.0 / (in_features ** 0.5)
    w = jax.random.uniform(k_w, (out_features, in_features), dtype,
                           minval=-bound, maxval=bound)
    b = jax.random.uniform(k_b, (out_features,), dtype,
                           minval=-bound, maxval=bound)
    return w, b


if __name__ == "__main__":
    # Small, deterministic example graph.
    num_nodes, node_size, edge_size, num_edges = 16, 32, 16, 24
    hidden_msg = (2 * node_size + edge_size) // 2     # 40
    hidden_comb = 3 * node_size // 2                  # 48

    root = jax.random.PRNGKey(0)
    k_nodes, k_edges, k_idx, k_params = jax.random.split(root, 4)
    node_vectors = jax.random.normal(k_nodes, (num_nodes, node_size), jnp.float32)
    edge_vectors = jax.random.normal(k_edges, (num_edges, edge_size), jnp.float32)
    edge_indices = jax.random.randint(k_idx, (num_edges, 2), 0, num_nodes, jnp.int32)

    k1, k2, k3, k4 = jax.random.split(k_params, 4)
    W1, b1 = init_linear(k1, 2 * node_size + edge_size, hidden_msg)
    W2, b2 = init_linear(k2, hidden_msg, node_size)
    W3, b3 = init_linear(k3, 2 * node_size, hidden_comb)
    W4, b4 = init_linear(k4, hidden_comb, node_size)
    params = (W1, b1, W2, b2, W3, b3, W4, b4)

    prepared = prepare_params(params, node_size, edge_size)

    out = dmpnn_forward(node_vectors, edge_vectors, edge_indices, prepared)
    out = jax.block_until_ready(out)

    ref = dmpnn_reference(node_vectors, edge_vectors, edge_indices, params)
    assert out.shape == (num_nodes, node_size)
    # bf16 matmul inputs + tanh-GELU => looser tolerance than pure-f32.
    assert jnp.allclose(out, ref, atol=5e-2, rtol=5e-2), \
        float(jnp.max(jnp.abs(out - ref)))

    print("KERNEL_OK")
</pallas_src>

<mosaic_0001>
module attributes {stable_mosaic.version = 11 : i64} {
  func.func @dmpnn_kernel(%arg0: memref<16x128xf32, #tpu.memory_space<vmem>>, %arg1: memref<32x128xf32, #tpu.memory_space<vmem>>, %arg2: memref<32x1xi32, #tpu.memory_space<vmem>>, %arg3: memref<32x1xi32, #tpu.memory_space<vmem>>, %arg4: memref<128x256xbf16, #tpu.memory_space<vmem>>, %arg5: memref<128x128xbf16, #tpu.memory_space<vmem>>, %arg6: memref<1x128xf32, #tpu.memory_space<vmem>>, %arg7: memref<128x128xbf16, #tpu.memory_space<vmem>>, %arg8: memref<1x128xf32, #tpu.memory_space<vmem>>, %arg9: memref<256x128xbf16, #tpu.memory_space<vmem>>, %arg10: memref<1x128xf32, #tpu.memory_space<vmem>>, %arg11: memref<128x128xbf16, #tpu.memory_space<vmem>>, %arg12: memref<1x128xf32, #tpu.memory_space<vmem>>, %arg13: memref<16x128xf32, #tpu.memory_space<vmem>>) attributes {dimension_semantics = [], scalar_prefetch = 0 : i64, scratch_operands = 0 : i64, tpu.core_type = #tpu.core_type<tc>} {
    %c0 = arith.constant 0 : index
    %c0_0 = arith.constant 0 : index
    %0 = vector.load %arg0[%c0, %c0_0] : memref<16x128xf32, #tpu.memory_space<vmem>>, vector<16x128xf32>
    %c0_1 = arith.constant 0 : index
    %c0_2 = arith.constant 0 : index
    %1 = vector.load %arg1[%c0_1, %c0_2] : memref<32x128xf32, #tpu.memory_space<vmem>>, vector<32x128xf32>
    %2 = arith.truncf %0 : vector<16x128xf32> to vector<16x128xbf16>
    %c0_3 = arith.constant 0 : index
    %c0_4 = arith.constant 0 : index
    %3 = vector.load %arg4[%c0_3, %c0_4] : memref<128x256xbf16, #tpu.memory_space<vmem>>, vector<128x256xbf16>
    %cst = arith.constant dense<0.000000e+00> : vector<16x256xf32>
    %4 = tpu.matmul %2, %3, %cst {dimension_numbers = #tpu.dot_dimension_numbers<[1], [0], [0], [1], [0, 0, 1, 1], [], []>} : vector<16x128xbf16>, vector<128x256xbf16>, vector<16x256xf32> -> vector<16x256xf32>
    %5 = vector.extract_strided_slice %4 {offsets = [0, 0], sizes = [16, 128], strides = [1, 1]} : vector<16x256xf32> to vector<16x128xf32>
    %6 = arith.truncf %5 : vector<16x128xf32> to vector<16x128xbf16>
    %7 = vector.extract_strided_slice %4 {offsets = [0, 128], sizes = [16, 128], strides = [1, 1]} : vector<16x256xf32> to vector<16x128xf32>
    %8 = arith.truncf %7 : vector<16x128xf32> to vector<16x128xbf16>
    %9 = arith.truncf %1 : vector<32x128xf32> to vector<32x128xbf16>
    %c0_5 = arith.constant 0 : index
    %c0_6 = arith.constant 0 : index
    %10 = vector.load %arg5[%c0_5, %c0_6] : memref<128x128xbf16, #tpu.memory_space<vmem>>, vector<128x128xbf16>
    %cst_7 = arith.constant dense<0.000000e+00> : vector<32x128xf32>
    %11 = tpu.matmul %9, %10, %cst_7 {dimension_numbers = #tpu.dot_dimension_numbers<[1], [0], [0], [1], [0, 0, 1, 1], [], []>} : vector<32x128xbf16>, vector<128x128xbf16>, vector<32x128xf32> -> vector<32x128xf32>
    %c0_8 = arith.constant 0 : index
    %c0_9 = arith.constant 0 : index
    %12 = vector.load %arg6[%c0_8, %c0_9] : memref<1x128xf32, #tpu.memory_space<vmem>>, vector<1x128xf32>
    %13 = vector.broadcast %12 : vector<1x128xf32> to vector<32x128xf32>
    %14 = arith.addf %11, %13 : vector<32x128xf32>
    %15 = tpu.iota {dimensions = array<i32: 1>} : vector<32x16xi32>
    %c0_10 = arith.constant 0 : index
    %c0_11 = arith.constant 0 : index
    %16 = vector.load %arg2[%c0_10, %c0_11] : memref<32x1xi32, #tpu.memory_space<vmem>>, vector<32x1xi32>
    %17 = vector.broadcast %16 : vector<32x1xi32> to vector<32x16xi32>
    %18 = arith.cmpi eq, %15, %17 : vector<32x16xi32>
    %19 = arith.extui %18 : vector<32x16xi1> to vector<32x16xi32>
    %20 = arith.sitofp %19 : vector<32x16xi32> to vector<32x16xf32>
    %21 = arith.truncf %20 : vector<32x16xf32> to vector<32x16xbf16>
    %c0_12 = arith.constant 0 : index
    %c0_13 = arith.constant 0 : index
    %22 = vector.load %arg3[%c0_12, %c0_13] : memref<32x1xi32, #tpu.memory_space<vmem>>, vector<32x1xi32>
    %23 = vector.broadcast %22 : vector<32x1xi32> to vector<32x16xi32>
    %24 = arith.cmpi eq, %15, %23 : vector<32x16xi32>
    %25 = arith.extui %24 : vector<32x16xi1> to vector<32x16xi32>
    %26 = arith.sitofp %25 : vector<32x16xi32> to vector<32x16xf32>
    %27 = arith.truncf %26 : vector<32x16xf32> to vector<32x16xbf16>
    %cst_14 = arith.constant dense<0.000000e+00> : vector<32x128xf32>
    %28 = tpu.matmul %21, %6, %cst_14 {dimension_numbers = #tpu.dot_dimension_numbers<[1], [0], [0], [1], [0, 0, 1, 1], [], []>} : vector<32x16xbf16>, vector<16x128xbf16>, vector<32x128xf32> -> vector<32x128xf32>
    %cst_15 = arith.constant dense<0.000000e+00> : vector<32x128xf32>
    %29 = tpu.matmul %27, %8, %cst_15 {dimension_numbers = #tpu.dot_dimension_numbers<[1], [0], [0], [1], [0, 0, 1, 1], [], []>} : vector<32x16xbf16>, vector<16x128xbf16>, vector<32x128xf32> -> vector<32x128xf32>
    %30 = arith.addf %28, %29 : vector<32x128xf32>
    %31 = arith.addf %30, %14 : vector<32x128xf32>
    %cst_16 = arith.constant 5.000000e-01 : f32
    %32 = vector.broadcast %cst_16 : f32 to vector<32x128xf32>
    %33 = arith.mulf %32, %31 : vector<32x128xf32>
    %cst_17 = arith.constant 4.471500e-02 : f32
    %34 = vector.broadcast %cst_17 : f32 to vector<32x128xf32>
    %35 = arith.mulf %34, %31 : vector<32x128xf32>
    %36 = arith.mulf %35, %31 : vector<32x128xf32>
    %37 = arith.mulf %36, %31 : vector<32x128xf32>
    %38 = arith.addf %31, %37 : vector<32x128xf32>
    %cst_18 = arith.constant 0.797884583 : f32
    %39 = vector.broadcast %cst_18 : f32 to vector<32x128xf32>
    %40 = arith.mulf %39, %38 : vector<32x128xf32>
    %41 = math.tanh %40 : vector<32x128xf32>
    %cst_19 = arith.constant 1.000000e+00 : f32
    %42 = vector.broadcast %cst_19 : f32 to vector<32x128xf32>
    %43 = arith.addf %42, %41 : vector<32x128xf32>
    %44 = arith.mulf %33, %43 : vector<32x128xf32>
    %45 = arith.truncf %44 : vector<32x128xf32> to vector<32x128xbf16>
    %c0_20 = arith.constant 0 : index
    %c0_21 = arith.constant 0 : index
    %46 = vector.load %arg7[%c0_20, %c0_21] : memref<128x128xbf16, #tpu.memory_space<vmem>>, vector<128x128xbf16>
    %cst_22 = arith.constant dense<0.000000e+00> : vector<32x128xf32>
    %47 = tpu.matmul %45, %46, %cst_22 {dimension_numbers = #tpu.dot_dimension_numbers<[1], [0], [0], [1], [0, 0, 1, 1], [], []>} : vector<32x128xbf16>, vector<128x128xbf16>, vector<32x128xf32> -> vector<32x128xf32>
    %c0_23 = arith.constant 0 : index
    %c0_24 = arith.constant 0 : index
    %48 = vector.load %arg8[%c0_23, %c0_24] : memref<1x128xf32, #tpu.memory_space<vmem>>, vector<1x128xf32>
    %49 = vector.broadcast %48 : vector<1x128xf32> to vector<32x128xf32>
    %50 = arith.addf %47, %49 : vector<32x128xf32>
    %cst_25 = arith.constant 5.000000e-01 : f32
    %51 = vector.broadcast %cst_25 : f32 to vector<32x128xf32>
    %52 = arith.mulf %51, %50 : vector<32x128xf32>
    %cst_26 = arith.constant 4.471500e-02 : f32
    %53 = vector.broadcast %cst_26 : f32 to vector<32x128xf32>
    %54 = arith.mulf %53, %50 : vector<32x128xf32>
    %55 = arith.mulf %54, %50 : vector<32x128xf32>
    %56 = arith.mulf %55, %50 : vector<32x128xf32>
    %57 = arith.addf %50, %56 : vector<32x128xf32>
    %cst_27 = arith.constant 0.797884583 : f32
    %58 = vector.broadcast %cst_27 : f32 to vector<32x128xf32>
    %59 = arith.mulf %58, %57 : vector<32x128xf32>
    %60 = math.tanh %59 : vector<32x128xf32>
    %cst_28 = arith.constant 1.000000e+00 : f32
    %61 = vector.broadcast %cst_28 : f32 to vector<32x128xf32>
    %62 = arith.addf %61, %60 : vector<32x128xf32>
    %63 = arith.mulf %52, %62 : vector<32x128xf32>
    %64 = arith.truncf %63 : vector<32x128xf32> to vector<32x128xbf16>
    %cst_29 = arith.constant dense<0.000000e+00> : vector<16x128xf32>
    %65 = tpu.matmul %27, %64, %cst_29 {dimension_numbers = #tpu.dot_dimension_numbers<[0], [0], [1], [1], [0, 1, 1, 1], [], []>} : vector<32x16xbf16>, vector<32x128xbf16>, vector<16x128xf32> -> vector<16x128xf32>
    %66 = arith.truncf %65 : vector<16x128xf32> to vector<16x128xbf16>
    %67 = tpu.concatenate %2, %66 in 1 : vector<16x128xbf16>, vector<16x128xbf16> -> vector<16x256xbf16>
    %c0_30 = arith.constant 0 : index
    %c0_31 = arith.constant 0 : index
    %68 = vector.load %arg9[%c0_30, %c0_31] : memref<256x128xbf16, #tpu.memory_space<vmem>>, vector<256x128xbf16>
    %cst_32 = arith.constant dense<0.000000e+00> : vector<16x128xf32>
    %69 = tpu.matmul %67, %68, %cst_32 {dimension_numbers = #tpu.dot_dimension_numbers<[1], [0], [0], [1], [0, 0, 1, 1], [], []>} : vector<16x256xbf16>, vector<256x128xbf16>, vector<16x128xf32> -> vector<16x128xf32>
    %c0_33 = arith.constant 0 : index
    %c0_34 = arith.constant 0 : index
    %70 = vector.load %arg10[%c0_33, %c0_34] : memref<1x128xf32, #tpu.memory_space<vmem>>, vector<1x128xf32>
    %71 = vector.broadcast %70 : vector<1x128xf32> to vector<16x128xf32>
    %72 = arith.addf %69, %71 : vector<16x128xf32>
    %cst_35 = arith.constant 5.000000e-01 : f32
    %73 = vector.broadcast %cst_35 : f32 to vector<16x128xf32>
    %74 = arith.mulf %73, %72 : vector<16x128xf32>
    %cst_36 = arith.constant 4.471500e-02 : f32
    %75 = vector.broadcast %cst_36 : f32 to vector<16x128xf32>
    %76 = arith.mulf %75, %72 : vector<16x128xf32>
    %77 = arith.mulf %76, %72 : vector<16x128xf32>
    %78 = arith.mulf %77, %72 : vector<16x128xf32>
    %79 = arith.addf %72, %78 : vector<16x128xf32>
    %cst_37 = arith.constant 0.797884583 : f32
    %80 = vector.broadcast %cst_37 : f32 to vector<16x128xf32>
    %81 = arith.mulf %80, %79 : vector<16x128xf32>
    %82 = math.tanh %81 : vector<16x128xf32>
    %cst_38 = arith.constant 1.000000e+00 : f32
    %83 = vector.broadcast %cst_38 : f32 to vector<16x128xf32>
    %84 = arith.addf %83, %82 : vector<16x128xf32>
    %85 = arith.mulf %74, %84 : vector<16x128xf32>
    %86 = arith.truncf %85 : vector<16x128xf32> to vector<16x128xbf16>
    %c0_39 = arith.constant 0 : index
    %c0_40 = arith.constant 0 : index
    %87 = vector.load %arg11[%c0_39, %c0_40] : memref<128x128xbf16, #tpu.memory_space<vmem>>, vector<128x128xbf16>
    %cst_41 = arith.constant dense<0.000000e+00> : vector<16x128xf32>
    %88 = tpu.matmul %86, %87, %cst_41 {dimension_numbers = #tpu.dot_dimension_numbers<[1], [0], [0], [1], [0, 0, 1, 1], [], []>} : vector<16x128xbf16>, vector<128x128xbf16>, vector<16x128xf32> -> vector<16x128xf32>
    %c0_42 = arith.constant 0 : index
    %c0_43 = arith.constant 0 : index
    %89 = vector.load %arg12[%c0_42, %c0_43] : memref<1x128xf32, #tpu.memory_space<vmem>>, vector<1x128xf32>
    %90 = vector.broadcast %89 : vector<1x128xf32> to vector<16x128xf32>
    %91 = arith.addf %88, %90 : vector<16x128xf32>
    %cst_44 = arith.constant 5.000000e-01 : f32
    %92 = vector.broadcast %cst_44 : f32 to vector<16x128xf32>
    %93 = arith.mulf %92, %91 : vector<16x128xf32>
    %cst_45 = arith.constant 4.471500e-02 : f32
    %94 = vector.broadcast %cst_45 : f32 to vector<16x128xf32>
    %95 = arith.mulf %94, %91 : vector<16x128xf32>
    %96 = arith.mulf %95, %91 : vector<16x128xf32>
    %97 = arith.mulf %96, %91 : vector<16x128xf32>
    %98 = arith.addf %91, %97 : vector<16x128xf32>
    %cst_46 = arith.constant 0.797884583 : f32
    %99 = vector.broadcast %cst_46 : f32 to vector<16x128xf32>
    %100 = arith.mulf %99, %98 : vector<16x128xf32>
    %101 = math.tanh %100 : vector<16x128xf32>
    %cst_47 = arith.constant 1.000000e+00 : f32
    %102 = vector.broadcast %cst_47 : f32 to vector<16x128xf32>
    %103 = arith.addf %102, %101 : vector<16x128xf32>
    %104 = arith.mulf %93, %103 : vector<16x128xf32>
    %105 = arith.addf %104, %0 : vector<16x128xf32>
    %c0_48 = arith.constant 0 : index
    %c0_49 = arith.constant 0 : index
    %106 = vector.load %arg13[%c0_48, %c0_49] : memref<16x128xf32, #tpu.memory_space<vmem>>, vector<16x128xf32>
    tpu.vector_store %arg13[%c0_48, %c0_49], %105 {strides = array<i32>} : memref<16x128xf32, #tpu.memory_space<vmem>>, vector<16x128xf32>,
    return
  }
}

</mosaic_0001>

<llo_original>
// kernel: tpu_custom_call.1
$region0: #{tpu_custom_call.1}
  #allocation0 [shape = 'u32[]', space=smem, size = 0x4, offset = 0x4, fixed_abs, tag = 'smem constant byte address 0x4 - core index']
  #allocation1 [shape = 'u32[144,128]{1,0:T(1,128)}', space=vmem, size = 0x12000, scoped, tag = 'internal scratch']
  %s0 = inlined_call_operand.vmem [shape: f32[16,128], index: 0, kind: input, shape index: {}]
  %s1 = inlined_call_operand.hbm [shape: f32[32,128], index: 1, kind: input, shape index: {}]
  %s2 = inlined_call_operand.vmem [shape: s32[32,1], index: 2, kind: input, shape index: {}]
  %s3 = inlined_call_operand.vmem [shape: s32[32,1], index: 3, kind: input, shape index: {}]
  %s4 = inlined_call_operand.hbm [shape: bf16[128,256], index: 4, kind: input, shape index: {}]
  %s5 = inlined_call_operand.vmem [shape: bf16[128,128], index: 5, kind: input, shape index: {}]
  %s6 = inlined_call_operand.vmem [shape: f32[1,128], index: 6, kind: input, shape index: {}]
  %s7 = inlined_call_operand.hbm [shape: bf16[128,128], index: 7, kind: input, shape index: {}]
  %s8 = inlined_call_operand.vmem [shape: f32[1,128], index: 8, kind: input, shape index: {}]
  %s9 = inlined_call_operand.hbm [shape: bf16[256,128], index: 9, kind: input, shape index: {}]
  %s10 = inlined_call_operand.vmem [shape: f32[1,128], index: 10, kind: input, shape index: {}]
  %s11 = inlined_call_operand.hbm [shape: bf16[128,128], index: 11, kind: input, shape index: {}]
  %s12 = inlined_call_operand.vmem [shape: f32[1,128], index: 12, kind: input, shape index: {}]
  %s13 = inlined_call_operand.hbm [shape: f32[16,128], index: 13, kind: output, shape index: {}]
  %s14 = sld [smem:[#allocation0]]
  $region82: #{tpu_custom_call.1} parent=0
    _
  %s16 = ssub.s32 1, %s14
  %s17 = scalar_select 0, %s16, %s14
  $region1: #{tpu_custom_call.1} parent=0
    #allocation2 [shape = 'u8[16384]{0}', space=vmem, size = 0x4000, scoped, tag = 'input window, operand 1, single buffered']
    #allocation3 [shape = 's32[1]{0}', space=sflag, size = 0x4, scoped, tag = 'scoped memory for tpu_custom_call.1']
    #allocation4 [shape = 's32[1]{0}', space=sflag, size = 0x4, scoped, tag = 'scoped memory for tpu_custom_call.1']
    #allocation5 [shape = 'u8[65536]{0}', space=vmem, size = 0x10000, scoped, tag = 'input window, operand 4, single buffered']
    #allocation6 [shape = 's32[1]{0}', space=sflag, size = 0x4, scoped, tag = 'scoped memory for tpu_custom_call.1']
    #allocation7 [shape = 'u8[32768]{0}', space=vmem, size = 0x8000, scoped, tag = 'input window, operand 7, single buffered']
    #allocation8 [shape = 'u8[65536]{0}', space=vmem, size = 0x10000, scoped, tag = 'input window, operand 9, single buffered']
    #allocation9 [shape = 's32[1]{0}', space=sflag, size = 0x4, scoped, tag = 'scoped memory for tpu_custom_call.1']
    #allocation10 [shape = 'u8[32768]{0}', space=vmem, size = 0x8000, scoped, tag = 'input window, operand 11, single buffered']
    #allocation11 [shape = 'u8[8192]{0}', space=vmem, size = 0x2000, scoped, tag = 'output window, operand 0, single buffered']
    %18 = vsyncpa [#allocation3], 0
    %19 = vsyncpa [#allocation6], 0
    %20 = vsyncpa [#allocation9], 0
    %21 = vsyncpa [#allocation4], 0
    // Predicated region
    $region2: #{tpu_custom_call.1} parent=1 // pred_check
      _
    $region3: #{tpu_custom_call.1} parent=1 // pred_check_branch
      %23 = sbr.rel (0) target = $region5
    $region4: #{tpu_custom_call.1} parent=1 // pred_region
      _
    $region5: #{tpu_custom_call.1} parent=1 // pred_fallthru
      _
    // Predicated region
    $region6: #{tpu_custom_call.1} parent=1 // pred_check
      _
    $region7: #{tpu_custom_call.1} parent=1 // pred_check_branch
      %25 = sbr.rel (0) target = $region9
    $region8: #{tpu_custom_call.1} parent=1 // pred_region
      %s27 = ssub.s32 512, 512
      %28 = vsyncadd [#allocation3], %s27
      %s29 = sshll.u32 [#allocation2], 4
      %s30 = int_to_ptr.vmem [resolvable:$true] %s29
      %35 = dma.hbm_to_vmem [thread:$0]  %s1, 512, %s30, [#allocation3], 128, 128, 8
    $region9: #{tpu_custom_call.1} parent=1 // pred_fallthru
      _
    // Predicated region
    $region10: #{tpu_custom_call.1} parent=1 // pred_check
      _
    $region11: #{tpu_custom_call.1} parent=1 // pred_check_branch
      %37 = sbr.rel (0) target = $region13
    $region12: #{tpu_custom_call.1} parent=1 // pred_region
      _
    $region13: #{tpu_custom_call.1} parent=1 // pred_fallthru
      _
    // Predicated region
    $region14: #{tpu_custom_call.1} parent=1 // pred_check
      _
    $region15: #{tpu_custom_call.1} parent=1 // pred_check_branch
      %39 = sbr.rel (0) target = $region17
    $region16: #{tpu_custom_call.1} parent=1 // pred_region
      _
    $region17: #{tpu_custom_call.1} parent=1 // pred_fallthru
      _
    // Predicated region
    $region18: #{tpu_custom_call.1} parent=1 // pred_check
      _
    $region19: #{tpu_custom_call.1} parent=1 // pred_check_branch
      %41 = sbr.rel (0) target = $region21
    $region20: #{tpu_custom_call.1} parent=1 // pred_region
      %s43 = ssub.s32 2048, 2048
      %44 = vsyncadd [#allocation6], %s43
      %s45 = sshll.u32 [#allocation5], 4
      %s46 = int_to_ptr.vmem [resolvable:$true] %s45
      %51 = dma.hbm_to_vmem [thread:$0]  %s4, 2048, %s46, [#allocation6], 128, 128, 8
    $region21: #{tpu_custom_call.1} parent=1 // pred_fallthru
      _
    // Predicated region
    $region22: #{tpu_custom_call.1} parent=1 // pred_check
      _
    $region23: #{tpu_custom_call.1} parent=1 // pred_check_branch
      %53 = sbr.rel (0) target = $region25
    $region24: #{tpu_custom_call.1} parent=1 // pred_region
      _
    $region25: #{tpu_custom_call.1} parent=1 // pred_fallthru
      _
    // Predicated region
    $region26: #{tpu_custom_call.1} parent=1 // pred_check
      _
    $region27: #{tpu_custom_call.1} parent=1 // pred_check_branch
      %55 = sbr.rel (0) target = $region29
    $region28: #{tpu_custom_call.1} parent=1 // pred_region
      _
    $region29: #{tpu_custom_call.1} parent=1 // pred_fallthru
      _
    // Predicated region
    $region30: #{tpu_custom_call.1} parent=1 // pred_check
      _
    $region31: #{tpu_custom_call.1} parent=1 // pred_check_branch
      %57 = sbr.rel (0) target = $region33
    $region32: #{tpu_custom_call.1} parent=1 // pred_region
      %s59 = ssub.s32 1024, 1024
      %60 = vsyncadd [#allocation6], %s59
      %s61 = sshll.u32 [#allocation7], 4
      %s62 = int_to_ptr.vmem [resolvable:$true] %s61
      %67 = dma.hbm_to_vmem [thread:$0]  %s7, 1024, %s62, [#allocation6], 64, 64, 4
    $region33: #{tpu_custom_call.1} parent=1 // pred_fallthru
      _
    // Predicated region
    $region34: #{tpu_custom_call.1} parent=1 // pred_check
      _
    $region35: #{tpu_custom_call.1} parent=1 // pred_check_branch
      %69 = sbr.rel (0) target = $region37
    $region36: #{tpu_custom_call.1} parent=1 // pred_region
      _
    $region37: #{tpu_custom_call.1} parent=1 // pred_fallthru
      _
    // Predicated region
    $region38: #{tpu_custom_call.1} parent=1 // pred_check
      _
    $region39: #{tpu_custom_call.1} parent=1 // pred_check_branch
      %71 = sbr.rel (0) target = $region41
    $region40: #{tpu_custom_call.1} parent=1 // pred_region
      %s73 = ssub.s32 2048, 2048
      %74 = vsyncadd [#allocation9], %s73
      %s75 = sshll.u32 [#allocation8], 4
      %s76 = int_to_ptr.vmem [resolvable:$true] %s75
      %81 = dma.hbm_to_vmem [thread:$0]  %s9, 2048, %s76, [#allocation9], 64, 64, 4
    $region41: #{tpu_custom_call.1} parent=1 // pred_fallthru
      _
    // Predicated region
    $region42: #{tpu_custom_call.1} parent=1 // pred_check
      _
    $region43: #{tpu_custom_call.1} parent=1 // pred_check_branch
      %83 = sbr.rel (0) target = $region45
    $region44: #{tpu_custom_call.1} parent=1 // pred_region
      _
    $region45: #{tpu_custom_call.1} parent=1 // pred_fallthru
      _
    // Predicated region
    $region46: #{tpu_custom_call.1} parent=1 // pred_check
      _
    $region47: #{tpu_custom_call.1} parent=1 // pred_check_branch
      %85 = sbr.rel (0) target = $region49
    $region48: #{tpu_custom_call.1} parent=1 // pred_region
      %s87 = ssub.s32 1024, 1024
      %88 = vsyncadd [#allocation9], %s87
      %s89 = sshll.u32 [#allocation10], 4
      %s90 = int_to_ptr.vmem [resolvable:$true] %s89
      %95 = dma.hbm_to_vmem [thread:$0]  %s11, 1024, %s90, [#allocation9], 64, 64, 4
    $region49: #{tpu_custom_call.1} parent=1 // pred_fallthru
      _
    // Predicated region
    $region50: #{tpu_custom_call.1} parent=1 // pred_check
      _
    $region51: #{tpu_custom_call.1} parent=1 // pred_check_branch
      %97 = sbr.rel (0) target = $region53
    $region52: #{tpu_custom_call.1} parent=1 // pred_region
      _
    $region53: #{tpu_custom_call.1} parent=1 // pred_fallthru
      _
    // Predicated region
    $region54: #{tpu_custom_call.1} parent=1 // pred_check
      _
    $region55: #{tpu_custom_call.1} parent=1 // pred_check_branch
      %99 = sbr.rel (0) target = $region57
    $region56: #{tpu_custom_call.1} parent=1 // pred_region
      %100 = dma.done [#allocation3], 512
    $region57: #{tpu_custom_call.1} parent=1 // pred_fallthru
      _
    // Predicated region
    $region58: #{tpu_custom_call.1} parent=1 // pred_check
      _
    $region59: #{tpu_custom_call.1} parent=1 // pred_check_branch
      %102 = sbr.rel (0) target = $region61
    $region60: #{tpu_custom_call.1} parent=1 // pred_region
      %103 = dma.done [#allocation6], 2048
    $region61: #{tpu_custom_call.1} parent=1 // pred_fallthru
      _
    // Predicated region
    $region62: #{tpu_custom_call.1} parent=1 // pred_check
      _
    $region63: #{tpu_custom_call.1} parent=1 // pred_check_branch
      %105 = sbr.rel (0) target = $region65
    $region64: #{tpu_custom_call.1} parent=1 // pred_region
      %106 = dma.done [#allocation6], 1024
    $region65: #{tpu_custom_call.1} parent=1 // pred_fallthru
      _
    // Predicated region
    $region66: #{tpu_custom_call.1} parent=1 // pred_check
      _
    $region67: #{tpu_custom_call.1} parent=1 // pred_check_branch
      %108 = sbr.rel (0) target = $region69
    $region68: #{tpu_custom_call.1} parent=1 // pred_region
      %109 = dma.done [#allocation9], 2048
    $region69: #{tpu_custom_call.1} parent=1 // pred_fallthru
      _
    // Predicated region
    $region70: #{tpu_custom_call.1} parent=1 // pred_check
      _
    $region71: #{tpu_custom_call.1} parent=1 // pred_check_branch
      %111 = sbr.rel (0) target = $region73
    $region72: #{tpu_custom_call.1} parent=1 // pred_region
      %112 = dma.done [#allocation9], 1024
    $region73: #{tpu_custom_call.1} parent=1 // pred_fallthru
      _
    %v114 = vld [vmem:[%s0] sm:$0xff]
    %v115 = vld [vmem:[%s0 + $0x8] sm:$0xff]
    %v116 = vld [vmem:[#allocation2] sm:$0xff]
    %v117 = vld [vmem:[#allocation2 + $0x8] sm:$0xff]
    %v118 = vld [vmem:[#allocation2 + $0x10] sm:$0xff]
    %v119 = vld [vmem:[#allocation2 + $0x18] sm:$0xff]
    %v120 = vpack.c.bf16 %v115, %v114
    %v121 = vld [vmem:[#allocation5] sm:$0xff]
    %v122 = vld [vmem:[#allocation5 + $0x8] sm:$0xff]
    %v123 = vld [vmem:[#allocation5 + $0x10] sm:$0xff]
    %v124 = vld [vmem:[#allocation5 + $0x18] sm:$0xff]
    %v125 = vld [vmem:[#allocation5 + $0x20] sm:$0xff]
    %v126 = vld [vmem:[#allocation5 + $0x28] sm:$0xff]
    %v127 = vld [vmem:[#allocation5 + $0x30] sm:$0xff]
    %v128 = vld [vmem:[#allocation5 + $0x38] sm:$0xff]
    %v129 = vld [vmem:[#allocation5 + $0x40] sm:$0xff]
    %v130 = vld [vmem:[#allocation5 + $0x48] sm:$0xff]
    %v131 = vld [vmem:[#allocation5 + $0x50] sm:$0xff]
    %v132 = vld [vmem:[#allocation5 + $0x58] sm:$0xff]
    %v133 = vld [vmem:[#allocation5 + $0x60] sm:$0xff]
    %v134 = vld [vmem:[#allocation5 + $0x68] sm:$0xff]
    %v135 = vld [vmem:[#allocation5 + $0x70] sm:$0xff]
    %v136 = vld [vmem:[#allocation5 + $0x78] sm:$0xff]
    %v153 = vunpack.c.l.b16 %v121
    %v154 = vunpack.c.h.b16 %v121
    %v155 = vunpack.c.l.b16 %v122
    %v156 = vunpack.c.h.b16 %v122
    %v157 = vunpack.c.l.b16 %v123
    %v158 = vunpack.c.h.b16 %v123
    %v159 = vunpack.c.l.b16 %v124
    %v160 = vunpack.c.h.b16 %v124
    %v161 = vunpack.c.l.b16 %v125
    %v162 = vunpack.c.h.b16 %v125
    %v163 = vunpack.c.l.b16 %v126
    %v164 = vunpack.c.h.b16 %v126
    %v165 = vunpack.c.l.b16 %v127
    %v166 = vunpack.c.h.b16 %v127
    %v167 = vunpack.c.l.b16 %v128
    %v168 = vunpack.c.h.b16 %v128
    %v169 = vunpack.c.l.b16 %v129
    %v170 = vunpack.c.h.b16 %v129
    %v171 = vunpack.c.l.b16 %v130
    %v172 = vunpack.c.h.b16 %v130
    %v173 = vunpack.c.l.b16 %v131
    %v174 = vunpack.c.h.b16 %v131
    %v175 = vunpack.c.l.b16 %v132
    %v176 = vunpack.c.h.b16 %v132
    %v177 = vunpack.c.l.b16 %v133
    %v178 = vunpack.c.h.b16 %v133
    %v179 = vunpack.c.l.b16 %v134
    %v180 = vunpack.c.h.b16 %v134
    %v181 = vunpack.c.l.b16 %v135
    %v182 = vunpack.c.h.b16 %v135
    %v183 = vunpack.c.l.b16 %v136
    %v184 = vunpack.c.h.b16 %v136
    %v185 = vpack.c.b16 %v155, %v153
    %v186 = vpack.c.b16 %v156, %v154
    %v187 = vpack.c.b16 %v159, %v157
    %v188 = vpack.c.b16 %v160, %v158
    %v189 = vpack.c.b16 %v163, %v161
    %v190 = vpack.c.b16 %v164, %v162
    %v191 = vpack.c.b16 %v167, %v165
    %v192 = vpack.c.b16 %v168, %v166
    %v193 = vpack.c.b16 %v171, %v169
    %v194 = vpack.c.b16 %v172, %v170
    %v195 = vpack.c.b16 %v175, %v173
    %v196 = vpack.c.b16 %v176, %v174
    %v197 = vpack.c.b16 %v179, %v177
    %v198 = vpack.c.b16 %v180, %v178
    %v199 = vpack.c.b16 %v183, %v181
    %v200 = vpack.c.b16 %v184, %v182
    %217 = vmatprep.subr.bf16.mxu0 %v186
    %218 = vmatpush1.bf16.msra.mxu0 %v185
    %219 = vmatprep.subr.bf16.mxu0 %v188
    %220 = vmatpush1.bf16.msra.mxu0 %v187
    %221 = vmatprep.subr.bf16.mxu0 %v190
    %222 = vmatpush1.bf16.msra.mxu0 %v189
    %223 = vmatprep.subr.bf16.mxu0 %v192
    %224 = vmatpush1.bf16.msra.mxu0 %v191
    %225 = vmatprep.subr.bf16.mxu0 %v194
    %226 = vmatpush1.bf16.msra.mxu0 %v193
    %227 = vmatprep.subr.bf16.mxu0 %v196
    %228 = vmatpush1.bf16.msra.mxu0 %v195
    %229 = vmatprep.subr.bf16.mxu0 %v198
    %230 = vmatpush1.bf16.msra.mxu0 %v197
    %231 = vmatprep.subr.bf16.mxu0 %v200
    %232 = vmatpush1.bf16.msra.mxu0 %v199
    %233 = vmatprep.subr.bf16.mxu0 0
    %234 = vmatpush1.bf16.msra.mxu0 0
    %235 = vmatprep.subr.bf16.mxu0 0
    %236 = vmatpush1.bf16.msra.mxu0 0
    %237 = vmatprep.subr.bf16.mxu0 0
    %238 = vmatpush1.bf16.msra.mxu0 0
    %239 = vmatprep.subr.bf16.mxu0 0
    %240 = vmatpush1.bf16.msra.mxu0 0
    %241 = vmatprep.subr.bf16.mxu0 0
    %242 = vmatpush1.bf16.msra.mxu0 0
    %243 = vmatprep.subr.bf16.mxu0 0
    %244 = vmatpush1.bf16.msra.mxu0 0
    %245 = vmatprep.subr.bf16.mxu0 0
    %246 = vmatpush1.bf16.msra.mxu0 0
    %247 = vmatprep.subr.bf16.mxu0 0
    %248 = vmatpush1.bf16.msra.mxu0 0
    %249 = vmatprep.mubr.bf16.mxu0 0
    %250 = vmatmul.mubr.bf16.gmra.mrb[0].mxu0 %v120
    %v251 = vpop.f32.mrb[0].mxu0
    %v252 = vadd.f32 0.0, %v251
    %v253 = vpop.f32.mrb[0].mxu0
    %v254 = vadd.f32 0.0, %v253
    %v255 = vpop.f32.mrb[0].mxu0
    %v256 = vadd.f32 0.0, %v255
    %v257 = vpop.f32.mrb[0].mxu0
    %v258 = vadd.f32 0.0, %v257
    %259 = vdwg.mxu0
    %v260 = vpack.c.bf16 %v256, %v252
    %v261 = vpack.c.bf16 %v258, %v254
    %v262 = vpack.c.bf16 %v117, %v116
    %v263 = vpack.c.bf16 %v119, %v118
    %v264 = vld [vmem:[%s5] sm:$0xf]
    %v265 = vld [vmem:[%s5 + $0x4] sm:$0xf]
    %v266 = vld [vmem:[%s5 + $0x8] sm:$0xf]
    %v267 = vld [vmem:[%s5 + $0xc] sm:$0xf]
    %v268 = vld [vmem:[%s5 + $0x10] sm:$0xf]
    %v269 = vld [vmem:[%s5 + $0x14] sm:$0xf]
    %v270 = vld [vmem:[%s5 + $0x18] sm:$0xf]
    %v271 = vld [vmem:[%s5 + $0x1c] sm:$0xf]
    %v272 = vld [vmem:[%s5 + $0x20] sm:$0xf]
    %v273 = vld [vmem:[%s5 + $0x24] sm:$0xf]
    %v274 = vld [vmem:[%s5 + $0x28] sm:$0xf]
    %v275 = vld [vmem:[%s5 + $0x2c] sm:$0xf]
    %v276 = vld [vmem:[%s5 + $0x30] sm:$0xf]
    %v277 = vld [vmem:[%s5 + $0x34] sm:$0xf]
    %v278 = vld [vmem:[%s5 + $0x38] sm:$0xf]
    %v279 = vld [vmem:[%s5 + $0x3c] sm:$0xf]
    %v280 = vld [vmem:[%s6] sm:$0x1]
    %v282 = vlaneseq
    %v283 = vshrl.u32 %v282, 7
    %v284 = vsub.s32 0, %v283
    %v285 = vrot.slane %v280, %v284
    %v303 = vunpack.c.l.b16 %v264
    %v304 = vunpack.c.l.b16 %v265
    %v305 = vunpack.c.l.b16 %v266
    %v306 = vunpack.c.l.b16 %v267
    %v307 = vunpack.c.l.b16 %v268
    %v308 = vunpack.c.l.b16 %v269
    %v309 = vunpack.c.l.b16 %v270
    %v310 = vunpack.c.l.b16 %v271
    %v311 = vunpack.c.l.b16 %v272
    %v312 = vunpack.c.l.b16 %v273
    %v313 = vunpack.c.l.b16 %v274
    %v314 = vunpack.c.l.b16 %v275
    %v315 = vunpack.c.l.b16 %v276
    %v316 = vunpack.c.l.b16 %v277
    %v317 = vunpack.c.l.b16 %v278
    %v318 = vunpack.c.l.b16 %v279
    %v319 = vpack.c.b16 %v304, %v303
    %v320 = vpack.c.b16 %v306, %v305
    %v321 = vpack.c.b16 %v308, %v307
    %v322 = vpack.c.b16 %v310, %v309
    %v323 = vpack.c.b16 %v312, %v311
    %v324 = vpack.c.b16 %v314, %v313
    %v325 = vpack.c.b16 %v316, %v315
    %v326 = vpack.c.b16 %v318, %v317
    %335 = vmatprep.subr.bf16.mxu0 0
    %336 = vmatpush1.bf16.msra.mxu0 %v319
    %337 = vmatprep.subr.bf16.mxu0 0
    %338 = vmatpush1.bf16.msra.mxu0 %v320
    %339 = vmatprep.subr.bf16.mxu0 0
    %340 = vmatpush1.bf16.msra.mxu0 %v321
    %341 = vmatprep.subr.bf16.mxu0 0
    %342 = vmatpush1.bf16.msra.mxu0 %v322
    %343 = vmatprep.subr.bf16.mxu0 0
    %344 = vmatpush1.bf16.msra.mxu0 %v323
    %345 = vmatprep.subr.bf16.mxu0 0
    %346 = vmatpush1.bf16.msra.mxu0 %v324
    %347 = vmatprep.subr.bf16.mxu0 0
    %348 = vmatpush1.bf16.msra.mxu0 %v325
    %349 = vmatprep.subr.bf16.mxu0 0
    %350 = vmatpush1.bf16.msra.mxu0 %v326
    %351 = vmatprep.subr.bf16.mxu0 0
    %352 = vmatpush1.bf16.msra.mxu0 0
    %353 = vmatprep.subr.bf16.mxu0 0
    %354 = vmatpush1.bf16.msra.mxu0 0
    %355 = vmatprep.subr.bf16.mxu0 0
    %356 = vmatpush1.bf16.msra.mxu0 0
    %357 = vmatprep.subr.bf16.mxu0 0
    %358 = vmatpush1.bf16.msra.mxu0 0
    %359 = vmatprep.subr.bf16.mxu0 0
    %360 = vmatpush1.bf16.msra.mxu0 0
    %361 = vmatprep.subr.bf16.mxu0 0
    %362 = vmatpush1.bf16.msra.mxu0 0
    %363 = vmatprep.subr.bf16.mxu0 0
    %364 = vmatpush1.bf16.msra.mxu0 0
    %365 = vmatprep.subr.bf16.mxu0 0
    %366 = vmatpush1.bf16.msra.mxu0 0
    %367 = vmatprep.mubr.bf16.mxu0 0
    %368 = vmatmul.mubr.bf16.gmra.mrb[0].mxu0 %v262
    %v369 = vpop.f32.mrb[0].mxu0
    %v370 = vadd.f32 %v285, %v369
    %v371 = vpop.f32.mrb[0].mxu0
    %v372 = vpop.f32.mrb[0].mxu0
    %v373 = vadd.f32 %v285, %v372
    %v374 = vpop.f32.mrb[0].mxu0
    %375 = vmatprep.mubr.bf16.mxu0 0
    %376 = vmatmul.mubr.bf16.gmra.mrb[0].mxu0 %v263
    %v377 = vpop.f32.mrb[0].mxu0
    %v378 = vadd.f32 %v285, %v377
    %v379 = vpop.f32.mrb[0].mxu0
    %v380 = vpop.f32.mrb[0].mxu0
    %v381 = vadd.f32 %v285, %v380
    %v382 = vpop.f32.mrb[0].mxu0
    %383 = vdwg.mxu0
    %v384 = vlaneseq
    %v385 = vand.u32 %v384, 127
    %v386 = vld [vmem:[%s2] sm:$0xff]
    %v387 = vld [vmem:[%s2 + $0x8] sm:$0xff]
    %v388 = vld [vmem:[%s2 + $0x10] sm:$0xff]
    %v389 = vld [vmem:[%s2 + $0x18] sm:$0xff]
    %390 = vset.pattern.permute.xlu0 0
    %391 = vperm.xlu0 %390, %v386
    %v392 = vpop.permute.xlu0 %391
    %393 = vset.pattern.permute.xlu0 0
    %394 = vperm.xlu0 %393, %v387
    %v395 = vpop.permute.xlu0 %394
    %396 = vset.pattern.permute.xlu0 0
    %397 = vperm.xlu0 %396, %v388
    %v398 = vpop.permute.xlu0 %397
    %399 = vset.pattern.permute.xlu0 0
    %400 = vperm.xlu0 %399, %v389
    %v401 = vpop.permute.xlu0 %400
    %vm402 = vcmp.eq.s32.totalorder %v385, %v392
    %vm403 = vcmp.eq.s32.totalorder %v385, %v395
    %vm404 = vcmp.eq.s32.totalorder %v385, %v398
    %vm405 = vcmp.eq.s32.totalorder %v385, %v401
    %v406 = vsel %vm402, 1, 0
    %v407 = vsel %vm403, 1, 0
    %v408 = vsel %vm404, 1, 0
    %v409 = vsel %vm405, 1, 0
    %v410 = vcvt.s32.f32 %v406
    %v411 = vcvt.s32.f32 %v407
    %v412 = vcvt.s32.f32 %v408
    %v413 = vcvt.s32.f32 %v409
    %v414 = vpack.c.bf16 %v411, %v410
    %v415 = vpack.c.bf16 %v413, %v412
    %v416 = vld [vmem:[%s3] sm:$0xff]
    %v417 = vld [vmem:[%s3 + $0x8] sm:$0xff]
    %v418 = vld [vmem:[%s3 + $0x10] sm:$0xff]
    %v419 = vld [vmem:[%s3 + $0x18] sm:$0xff]
    %420 = vset.pattern.permute.xlu0 0
    %421 = vperm.xlu0 %420, %v416
    %v422 = vpop.permute.xlu0 %421
    %423 = vset.pattern.permute.xlu0 0
    %424 = vperm.xlu0 %423, %v417
    %v425 = vpop.permute.xlu0 %424
    %426 = vset.pattern.permute.xlu0 0
    %427 = vperm.xlu0 %426, %v418
    %v428 = vpop.permute.xlu0 %427
    %429 = vset.pattern.permute.xlu0 0
    %430 = vperm.xlu0 %429, %v419
    %v431 = vpop.permute.xlu0 %430
    %vm432 = vcmp.eq.s32.totalorder %v385, %v422
    %vm433 = vcmp.eq.s32.totalorder %v385, %v425
    %vm434 = vcmp.eq.s32.totalorder %v385, %v428
    %vm435 = vcmp.eq.s32.totalorder %v385, %v431
    %v436 = vsel %vm432, 1, 0
    %v437 = vsel %vm433, 1, 0
    %v438 = vsel %vm434, 1, 0
    %v439 = vsel %vm435, 1, 0
    %v440 = vcvt.s32.f32 %v436
    %v441 = vcvt.s32.f32 %v437
    %v442 = vcvt.s32.f32 %v438
    %v443 = vcvt.s32.f32 %v439
    %v444 = vpack.c.bf16 %v441, %v440
    %v445 = vpack.c.bf16 %v443, %v442
    %vm446 = vcmask 130048
    %v448 = vsel %vm446, %v444, 0
    %v451 = vsel %vm446, %v445, 0
    %453 = vmatprep.subr.bf16.mxu0 0
    %454 = vmatpush1.bf16.msra.mxu0 %v261
    %455 = vmatprep.subr.bf16.mxu0 0
    %456 = vmatpush1.bf16.msra.mxu0 0
    %457 = vmatprep.subr.bf16.mxu0 0
    %458 = vmatpush1.bf16.msra.mxu0 0
    %459 = vmatprep.subr.bf16.mxu0 0
    %460 = vmatpush1.bf16.msra.mxu0 0
    %461 = vmatprep.subr.bf16.mxu0 0
    %462 = vmatpush1.bf16.msra.mxu0 0
    %463 = vmatprep.subr.bf16.mxu0 0
    %464 = vmatpush1.bf16.msra.mxu0 0
    %465 = vmatprep.subr.bf16.mxu0 0
    %466 = vmatpush1.bf16.msra.mxu0 0
    %467 = vmatprep.subr.bf16.mxu0 0
    %468 = vmatpush1.bf16.msra.mxu0 0
    %469 = vmatprep.subr.bf16.mxu0 0
    %470 = vmatpush1.bf16.msra.mxu0 0
    %471 = vmatprep.subr.bf16.mxu0 0
    %472 = vmatpush1.bf16.msra.mxu0 0
    %473 = vmatprep.subr.bf16.mxu0 0
    %474 = vmatpush1.bf16.msra.mxu0 0
    %475 = vmatprep.subr.bf16.mxu0 0
    %476 = vmatpush1.bf16.msra.mxu0 0
    %477 = vmatprep.subr.bf16.mxu0 0
    %478 = vmatpush1.bf16.msra.mxu0 0
    %479 = vmatprep.subr.bf16.mxu0 0
    %480 = vmatpush1.bf16.msra.mxu0 0
    %481 = vmatprep.subr.bf16.mxu0 0
    %482 = vmatpush1.bf16.msra.mxu0 0
    %483 = vmatprep.subr.bf16.mxu0 0
    %484 = vmatpush1.bf16.msra.mxu0 0
    %485 = vmatprep.mubr.bf16.mxu0 0
    %486 = vmatmul.mubr.bf16.gmra.mrb[0].mxu0 %v448
    %v487 = vpop.f32.mrb[0].mxu0
    %v488 = vadd.f32 0.0, %v487
    %v489 = vpop.f32.mrb[0].mxu0
    %v490 = vpop.f32.mrb[0].mxu0
    %v491 = vadd.f32 0.0, %v490
    %v492 = vpop.f32.mrb[0].mxu0
    %493 = vmatprep.mubr.bf16.mxu0 0
    %494 = vmatmul.mubr.bf16.gmra.mrb[0].mxu0 %v451
    %v495 = vpop.f32.mrb[0].mxu0
    %v496 = vadd.f32 0.0, %v495
    %v497 = vpop.f32.mrb[0].mxu0
    %v498 = vpop.f32.mrb[0].mxu0
    %v499 = vadd.f32 0.0, %v498
    %v500 = vpop.f32.mrb[0].mxu0
    %501 = vdwg.mxu0
    %v503 = vsel %vm446, %v414, 0
    %v506 = vsel %vm446, %v415, 0
    %508 = vmatprep.subr.bf16.mxu0 0
    %509 = vmatpush1.bf16.msra.mxu0 %v260
    %510 = vmatprep.subr.bf16.mxu0 0
    %511 = vmatpush1.bf16.msra.mxu0 0
    %512 = vmatprep.subr.bf16.mxu0 0
    %513 = vmatpush1.bf16.msra.mxu0 0
    %514 = vmatprep.subr.bf16.mxu0 0
    %515 = vmatpush1.bf16.msra.mxu0 0
    %516 = vmatprep.subr.bf16.mxu0 0
    %517 = vmatpush1.bf16.msra.mxu0 0
    %518 = vmatprep.subr.bf16.mxu0 0
    %519 = vmatpush1.bf16.msra.mxu0 0
    %520 = vmatprep.subr.bf16.mxu0 0
    %521 = vmatpush1.bf16.msra.mxu0 0
    %522 = vmatprep.subr.bf16.mxu0 0
    %523 = vmatpush1.bf16.msra.mxu0 0
    %524 = vmatprep.subr.bf16.mxu0 0
    %525 = vmatpush1.bf16.msra.mxu0 0
    %526 = vmatprep.subr.bf16.mxu0 0
    %527 = vmatpush1.bf16.msra.mxu0 0
    %528 = vmatprep.subr.bf16.mxu0 0
    %529 = vmatpush1.bf16.msra.mxu0 0
    %530 = vmatprep.subr.bf16.mxu0 0
    %531 = vmatpush1.bf16.msra.mxu0 0
    %532 = vmatprep.subr.bf16.mxu0 0
    %533 = vmatpush1.bf16.msra.mxu0 0
    %534 = vmatprep.subr.bf16.mxu0 0
    %535 = vmatpush1.bf16.msra.mxu0 0
    %536 = vmatprep.subr.bf16.mxu0 0
    %537 = vmatpush1.bf16.msra.mxu0 0
    %538 = vmatprep.subr.bf16.mxu0 0
    %539 = vmatpush1.bf16.msra.mxu0 0
    %540 = vmatprep.mubr.bf16.mxu0 0
    %541 = vmatmul.mubr.bf16.gmra.mrb[0].mxu0 %v503
    %v542 = vpop.f32.mrb[0].mxu0
    %v543 = vadd.f32 %v488, %v542
    %v544 = vpop.f32.mrb[0].mxu0
    %v545 = vpop.f32.mrb[0].mxu0
    %v546 = vadd.f32 %v491, %v545
    %v547 = vpop.f32.mrb[0].mxu0
    %548 = vmatprep.mubr.bf16.mxu0 0
    %549 = vmatmul.mubr.bf16.gmra.mrb[0].mxu0 %v506
    %v550 = vpop.f32.mrb[0].mxu0
    %v551 = vadd.f32 %v496, %v550
    %v552 = vpop.f32.mrb[0].mxu0
    %v553 = vpop.f32.mrb[0].mxu0
    %v554 = vadd.f32 %v499, %v553
    %v555 = vpop.f32.mrb[0].mxu0
    %556 = vdwg.mxu0
    %v557 = vadd.f32 %v543, %v370
    %v558 = vadd.f32 %v546, %v373
    %v559 = vadd.f32 %v551, %v378
    %v560 = vadd.f32 %v554, %v381
    %v561 = vmul.f32 %v557, 0.5
    %v562 = vmul.f32 %v558, 0.5
    %v563 = vmul.f32 %v559, 0.5
    %v564 = vmul.f32 %v560, 0.5
    %v565 = vmul.f32 %v557, 0.044715
    %v566 = vmul.f32 %v558, 0.044715
    %v567 = vmul.f32 %v559, 0.044715
    %v568 = vmul.f32 %v560, 0.044715
    %v569 = vmul.f32 %v565, %v557
    %v570 = vmul.f32 %v566, %v558
    %v571 = vmul.f32 %v567, %v559
    %v572 = vmul.f32 %v568, %v560
    %v573 = vmul.f32 %v569, %v557
    %v574 = vmul.f32 %v570, %v558
    %v575 = vmul.f32 %v571, %v559
    %v576 = vmul.f32 %v572, %v560
    %v577 = vadd.f32 %v557, %v573
    %v578 = vadd.f32 %v558, %v574
    %v579 = vadd.f32 %v559, %v575
    %v580 = vadd.f32 %v560, %v576
    %v581 = vmul.f32 %v577, 0.7978846
    %v582 = vmul.f32 %v578, 0.7978846
    %v583 = vmul.f32 %v579, 0.7978846
    %v584 = vmul.f32 %v580, 0.7978846
    %v585 = vtanh.pop %v581
    %v586 = vtanh.pop %v582
    %v587 = vtanh.pop %v583
    %v588 = vtanh.pop %v584
    %v589 = vadd.f32 %v585, 1.0
    %v590 = vadd.f32 %v586, 1.0
    %v591 = vadd.f32 %v587, 1.0
    %v592 = vadd.f32 %v588, 1.0
    %v593 = vmul.f32 %v561, %v589
    %v594 = vmul.f32 %v562, %v590
    %v595 = vmul.f32 %v563, %v591
    %v596 = vmul.f32 %v564, %v592
    %v597 = vpack.c.bf16 %v594, %v593
    %v598 = vpack.c.bf16 %v596, %v595
    %v599 = vld [vmem:[#allocation7] sm:$0xf]
    %v600 = vld [vmem:[#allocation7 + $0x4] sm:$0xf]
    %v601 = vld [vmem:[#allocation7 + $0x8] sm:$0xf]
    %v602 = vld [vmem:[#allocation7 + $0xc] sm:$0xf]
    %v603 = vld [vmem:[#allocation7 + $0x10] sm:$0xf]
    %v604 = vld [vmem:[#allocation7 + $0x14] sm:$0xf]
    %v605 = vld [vmem:[#allocation7 + $0x18] sm:$0xf]
    %v606 = vld [vmem:[#allocation7 + $0x1c] sm:$0xf]
    %v607 = vld [vmem:[#allocation7 + $0x20] sm:$0xf]
    %v608 = vld [vmem:[#allocation7 + $0x24] sm:$0xf]
    %v609 = vld [vmem:[#allocation7 + $0x28] sm:$0xf]
    %v610 = vld [vmem:[#allocation7 + $0x2c] sm:$0xf]
    %v611 = vld [vmem:[#allocation7 + $0x30] sm:$0xf]
    %v612 = vld [vmem:[#allocation7 + $0x34] sm:$0xf]
    %v613 = vld [vmem:[#allocation7 + $0x38] sm:$0xf]
    %v614 = vld [vmem:[#allocation7 + $0x3c] sm:$0xf]
    %v615 = vld [vmem:[%s8] sm:$0x1]
    %v617 = vlaneseq
    %v618 = vshrl.u32 %v617, 7
    %v619 = vsub.s32 0, %v618
    %v620 = vrot.slane %v615, %v619
    %v638 = vunpack.c.l.b16 %v599
    %v639 = vunpack.c.l.b16 %v600
    %v640 = vunpack.c.l.b16 %v601
    %v641 = vunpack.c.l.b16 %v602
    %v642 = vunpack.c.l.b16 %v603
    %v643 = vunpack.c.l.b16 %v604
    %v644 = vunpack.c.l.b16 %v605
    %v645 = vunpack.c.l.b16 %v606
    %v646 = vunpack.c.l.b16 %v607
    %v647 = vunpack.c.l.b16 %v608
    %v648 = vunpack.c.l.b16 %v609
    %v649 = vunpack.c.l.b16 %v610
    %v650 = vunpack.c.l.b16 %v611
    %v651 = vunpack.c.l.b16 %v612
    %v652 = vunpack.c.l.b16 %v613
    %v653 = vunpack.c.l.b16 %v614
    %v654 = vpack.c.b16 %v639, %v638
    %v655 = vpack.c.b16 %v641, %v640
    %v656 = vpack.c.b16 %v643, %v642
    %v657 = vpack.c.b16 %v645, %v644
    %v658 = vpack.c.b16 %v647, %v646
    %v659 = vpack.c.b16 %v649, %v648
    %v660 = vpack.c.b16 %v651, %v650
    %v661 = vpack.c.b16 %v653, %v652
    %670 = vmatprep.subr.bf16.mxu0 0
    %671 = vmatpush1.bf16.msra.mxu0 %v654
    %672 = vmatprep.subr.bf16.mxu0 0
    %673 = vmatpush1.bf16.msra.mxu0 %v655
    %674 = vmatprep.subr.bf16.mxu0 0
    %675 = vmatpush1.bf16.msra.mxu0 %v656
    %676 = vmatprep.subr.bf16.mxu0 0
    %677 = vmatpush1.bf16.msra.mxu0 %v657
    %678 = vmatprep.subr.bf16.mxu0 0
    %679 = vmatpush1.bf16.msra.mxu0 %v658
    %680 = vmatprep.subr.bf16.mxu0 0
    %681 = vmatpush1.bf16.msra.mxu0 %v659
    %682 = vmatprep.subr.bf16.mxu0 0
    %683 = vmatpush1.bf16.msra.mxu0 %v660
    %684 = vmatprep.subr.bf16.mxu0 0
    %685 = vmatpush1.bf16.msra.mxu0 %v661
    %686 = vmatprep.subr.bf16.mxu0 0
    %687 = vmatpush1.bf16.msra.mxu0 0
    %688 = vmatprep.subr.bf16.mxu0 0
    %689 = vmatpush1.bf16.msra.mxu0 0
    %690 = vmatprep.subr.bf16.mxu0 0
    %691 = vmatpush1.bf16.msra.mxu0 0
    %692 = vmatprep.subr.bf16.mxu0 0
    %693 = vmatpush1.bf16.msra.mxu0 0
    %694 = vmatprep.subr.bf16.mxu0 0
    %695 = vmatpush1.bf16.msra.mxu0 0
    %696 = vmatprep.subr.bf16.mxu0 0
    %697 = vmatpush1.bf16.msra.mxu0 0
    %698 = vmatprep.subr.bf16.mxu0 0
    %699 = vmatpush1.bf16.msra.mxu0 0
    %700 = vmatprep.subr.bf16.mxu0 0
    %701 = vmatpush1.bf16.msra.mxu0 0
    %702 = vmatprep.mubr.bf16.mxu0 0
    %703 = vmatmul.mubr.bf16.gmra.mrb[0].mxu0 %v597
    %v704 = vpop.f32.mrb[0].mxu0
    %v705 = vadd.f32 %v620, %v704
    %v706 = vpop.f32.mrb[0].mxu0
    %v707 = vpop.f32.mrb[0].mxu0
    %v708 = vadd.f32 %v620, %v707
    %v709 = vpop.f32.mrb[0].mxu0
    %710 = vmatprep.mubr.bf16.mxu0 0
    %711 = vmatmul.mubr.bf16.gmra.mrb[0].mxu0 %v598
    %v712 = vpop.f32.mrb[0].mxu0
    %v713 = vadd.f32 %v620, %v712
    %v714 = vpop.f32.mrb[0].mxu0
    %v715 = vpop.f32.mrb[0].mxu0
    %v716 = vadd.f32 %v620, %v715
    %v717 = vpop.f32.mrb[0].mxu0
    %718 = vdwg.mxu0
    %v719 = vmul.f32 %v705, 0.5
    %v720 = vmul.f32 %v708, 0.5
    %v721 = vmul.f32 %v713, 0.5
    %v722 = vmul.f32 %v716, 0.5
    %v723 = vmul.f32 %v705, 0.044715
    %v724 = vmul.f32 %v708, 0.044715
    %v725 = vmul.f32 %v713, 0.044715
    %v726 = vmul.f32 %v716, 0.044715
    %v727 = vmul.f32 %v723, %v705
    %v728 = vmul.f32 %v724, %v708
    %v729 = vmul.f32 %v725, %v713
    %v730 = vmul.f32 %v726, %v716
    %v731 = vmul.f32 %v727, %v705
    %v732 = vmul.f32 %v728, %v708
    %v733 = vmul.f32 %v729, %v713
    %v734 = vmul.f32 %v730, %v716
    %v735 = vadd.f32 %v705, %v731
    %v736 = vadd.f32 %v708, %v732
    %v737 = vadd.f32 %v713, %v733
    %v738 = vadd.f32 %v716, %v734
    %v739 = vmul.f32 %v735, 0.7978846
    %v740 = vmul.f32 %v736, 0.7978846
    %v741 = vmul.f32 %v737, 0.7978846
    %v742 = vmul.f32 %v738, 0.7978846
    %v743 = vtanh.pop %v739
    %v744 = vtanh.pop %v740
    %v745 = vtanh.pop %v741
    %v746 = vtanh.pop %v742
    %v747 = vadd.f32 %v743, 1.0
    %v748 = vadd.f32 %v744, 1.0
    %v749 = vadd.f32 %v745, 1.0
    %v750 = vadd.f32 %v746, 1.0
    %v751 = vmul.f32 %v719, %v747
    %v752 = vmul.f32 %v720, %v748
    %v753 = vmul.f32 %v721, %v749
    %v754 = vmul.f32 %v722, %v750
    %v755 = vpack.c.bf16 %v752, %v751
    %v756 = vpack.c.bf16 %v754, %v753
    %757 = vxpose.xlu0.c.b16.start [1/8] %v444, 128
    %758 = vxpose.xlu0.c.b16.cont [2/8] %v445, 128
    %759 = vxpose.xlu0.c.b16.cont [3/8] 0, 128
    %760 = vxpose.xlu0.c.b16.cont [4/8] 0, 128
    %761 = vxpose.xlu0.c.b16.cont [5/8] 0, 128
    %762 = vxpose.xlu0.c.b16.cont [6/8] 0, 128
    %763 = vxpose.xlu0.c.b16.cont [7/8] 0, 128
    %764 = vxpose.xlu0.c.b16.end [8/8] 0, 128
    %v765 = vpop.trf.xlu0
    %v766 = vpop.trf.xlu0
    %v767 = vpop.trf.xlu0
    %v768 = vpop.trf.xlu0
    %v769 = vpop.trf.xlu0
    %v770 = vpop.trf.xlu0
    %v771 = vpop.trf.xlu0
    %v772 = vpop.trf.xlu0
    %vm773 = vcmask 261120
    %v775 = vsel %vm773, %v765, 0
    %777 = vmatprep.subr.bf16.mxu0 0
    %778 = vmatpush1.bf16.msra.mxu0 %v755
    %779 = vmatprep.subr.bf16.mxu0 0
    %780 = vmatpush1.bf16.msra.mxu0 %v756
    %781 = vmatprep.subr.bf16.mxu0 0
    %782 = vmatpush1.bf16.msra.mxu0 0
    %783 = vmatprep.subr.bf16.mxu0 0
    %784 = vmatpush1.bf16.msra.mxu0 0
    %785 = vmatprep.subr.bf16.mxu0 0
    %786 = vmatpush1.bf16.msra.mxu0 0
    %787 = vmatprep.subr.bf16.mxu0 0
    %788 = vmatpush1.bf16.msra.mxu0 0
    %789 = vmatprep.subr.bf16.mxu0 0
    %790 = vmatpush1.bf16.msra.mxu0 0
    %791 = vmatprep.subr.bf16.mxu0 0
    %792 = vmatpush1.bf16.msra.mxu0 0
    %793 = vmatprep.subr.bf16.mxu0 0
    %794 = vmatpush1.bf16.msra.mxu0 0
    %795 = vmatprep.subr.bf16.mxu0 0
    %796 = vmatpush1.bf16.msra.mxu0 0
    %797 = vmatprep.subr.bf16.mxu0 0
    %798 = vmatpush1.bf16.msra.mxu0 0
    %799 = vmatprep.subr.bf16.mxu0 0
    %800 = vmatpush1.bf16.msra.mxu0 0
    %801 = vmatprep.subr.bf16.mxu0 0
    %802 = vmatpush1.bf16.msra.mxu0 0
    %803 = vmatprep.subr.bf16.mxu0 0
    %804 = vmatpush1.bf16.msra.mxu0 0
    %805 = vmatprep.subr.bf16.mxu0 0
    %806 = vmatpush1.bf16.msra.mxu0 0
    %807 = vmatprep.subr.bf16.mxu0 0
    %808 = vmatpush1.bf16.msra.mxu0 0
    %809 = vmatprep.mubr.bf16.mxu0 0
    %810 = vmatmul.mubr.bf16.gmra.mrb[0].mxu0 %v775
    %v811 = vpop.f32.mrb[0].mxu0
    %v812 = vadd.f32 0.0, %v811
    %v813 = vpop.f32.mrb[0].mxu0
    %v814 = vpop.f32.mrb[0].mxu0
    %v815 = vadd.f32 0.0, %v814
    %v816 = vpop.f32.mrb[0].mxu0
    %817 = vdwg.mxu0
    %v818 = vpack.c.bf16 %v815, %v812
    %v819 = vld [vmem:[#allocation8] sm:$0xf]
    %v820 = vld [vmem:[#allocation8 + $0x4] sm:$0xf]
    %v821 = vld [vmem:[#allocation8 + $0x8] sm:$0xf]
    %v822 = vld [vmem:[#allocation8 + $0xc] sm:$0xf]
    %v823 = vld [vmem:[#allocation8 + $0x10] sm:$0xf]
    %v824 = vld [vmem:[#allocation8 + $0x14] sm:$0xf]
    %v825 = vld [vmem:[#allocation8 + $0x18] sm:$0xf]
    %v826 = vld [vmem:[#allocation8 + $0x1c] sm:$0xf]
    %v827 = vld [vmem:[#allocation8 + $0x20] sm:$0xf]
    %v828 = vld [vmem:[#allocation8 + $0x24] sm:$0xf]
    %v829 = vld [vmem:[#allocation8 + $0x28] sm:$0xf]
    %v830 = vld [vmem:[#allocation8 + $0x2c] sm:$0xf]
    %v831 = vld [vmem:[#allocation8 + $0x30] sm:$0xf]
    %v832 = vld [vmem:[#allocation8 + $0x34] sm:$0xf]
    %v833 = vld [vmem:[#allocation8 + $0x38] sm:$0xf]
    %v834 = vld [vmem:[#allocation8 + $0x3c] sm:$0xf]
    %v835 = vld [vmem:[#allocation8 + $0x40] sm:$0xf]
    %v836 = vld [vmem:[#allocation8 + $0x44] sm:$0xf]
    %v837 = vld [vmem:[#allocation8 + $0x48] sm:$0xf]
    %v838 = vld [vmem:[#allocation8 + $0x4c] sm:$0xf]
    %v839 = vld [vmem:[#allocation8 + $0x50] sm:$0xf]
    %v840 = vld [vmem:[#allocation8 + $0x54] sm:$0xf]
    %v841 = vld [vmem:[#allocation8 + $0x58] sm:$0xf]
    %v842 = vld [vmem:[#allocation8 + $0x5c] sm:$0xf]
    %v843 = vld [vmem:[#allocation8 + $0x60] sm:$0xf]
    %v844 = vld [vmem:[#allocation8 + $0x64] sm:$0xf]
    %v845 = vld [vmem:[#allocation8 + $0x68] sm:$0xf]
    %v846 = vld [vmem:[#allocation8 + $0x6c] sm:$0xf]
    %v847 = vld [vmem:[#allocation8 + $0x70] sm:$0xf]
    %v848 = vld [vmem:[#allocation8 + $0x74] sm:$0xf]
    %v849 = vld [vmem:[#allocation8 + $0x78] sm:$0xf]
    %v850 = vld [vmem:[#allocation8 + $0x7c] sm:$0xf]
    %v851 = vld [vmem:[%s10] sm:$0x1]
    %v853 = vlaneseq
    %v854 = vshrl.u32 %v853, 7
    %v855 = vsub.s32 0, %v854
    %v856 = vrot.slane %v851, %v855
    %v890 = vunpack.c.l.b16 %v819
    %v891 = vunpack.c.l.b16 %v820
    %v892 = vunpack.c.l.b16 %v821
    %v893 = vunpack.c.l.b16 %v822
    %v894 = vunpack.c.l.b16 %v823
    %v895 = vunpack.c.l.b16 %v824
    %v896 = vunpack.c.l.b16 %v825
    %v897 = vunpack.c.l.b16 %v826
    %v898 = vunpack.c.l.b16 %v827
    %v899 = vunpack.c.l.b16 %v828
    %v900 = vunpack.c.l.b16 %v829
    %v901 = vunpack.c.l.b16 %v830
    %v902 = vunpack.c.l.b16 %v831
    %v903 = vunpack.c.l.b16 %v832
    %v904 = vunpack.c.l.b16 %v833
    %v905 = vunpack.c.l.b16 %v834
    %v906 = vunpack.c.l.b16 %v835
    %v907 = vunpack.c.l.b16 %v836
    %v908 = vunpack.c.l.b16 %v837
    %v909 = vunpack.c.l.b16 %v838
    %v910 = vunpack.c.l.b16 %v839
    %v911 = vunpack.c.l.b16 %v840
    %v912 = vunpack.c.l.b16 %v841
    %v913 = vunpack.c.l.b16 %v842
    %v914 = vunpack.c.l.b16 %v843
    %v915 = vunpack.c.l.b16 %v844
    %v916 = vunpack.c.l.b16 %v845
    %v917 = vunpack.c.l.b16 %v846
    %v918 = vunpack.c.l.b16 %v847
    %v919 = vunpack.c.l.b16 %v848
    %v920 = vunpack.c.l.b16 %v849
    %v921 = vunpack.c.l.b16 %v850
    %v922 = vpack.c.b16 %v891, %v890
    %v923 = vpack.c.b16 %v893, %v892
    %v924 = vpack.c.b16 %v895, %v894
    %v925 = vpack.c.b16 %v897, %v896
    %v926 = vpack.c.b16 %v899, %v898
    %v927 = vpack.c.b16 %v901, %v900
    %v928 = vpack.c.b16 %v903, %v902
    %v929 = vpack.c.b16 %v905, %v904
    %v930 = vpack.c.b16 %v907, %v906
    %v931 = vpack.c.b16 %v909, %v908
    %v932 = vpack.c.b16 %v911, %v910
    %v933 = vpack.c.b16 %v913, %v912
    %v934 = vpack.c.b16 %v915, %v914
    %v935 = vpack.c.b16 %v917, %v916
    %v936 = vpack.c.b16 %v919, %v918
    %v937 = vpack.c.b16 %v921, %v920
    %954 = vmatprep.subr.bf16.mxu0 0
    %955 = vmatpush1.bf16.msra.mxu0 %v922
    %956 = vmatprep.subr.bf16.mxu0 0
    %957 = vmatpush1.bf16.msra.mxu0 %v923
    %958 = vmatprep.subr.bf16.mxu0 0
    %959 = vmatpush1.bf16.msra.mxu0 %v924
    %960 = vmatprep.subr.bf16.mxu0 0
    %961 = vmatpush1.bf16.msra.mxu0 %v925
    %962 = vmatprep.subr.bf16.mxu0 0
    %963 = vmatpush1.bf16.msra.mxu0 %v926
    %964 = vmatprep.subr.bf16.mxu0 0
    %965 = vmatpush1.bf16.msra.mxu0 %v927
    %966 = vmatprep.subr.bf16.mxu0 0
    %967 = vmatpush1.bf16.msra.mxu0 %v928
    %968 = vmatprep.subr.bf16.mxu0 0
    %969 = vmatpush1.bf16.msra.mxu0 %v929
    %970 = vmatprep.subr.bf16.mxu0 0
    %971 = vmatpush1.bf16.msra.mxu0 %v930
    %972 = vmatprep.subr.bf16.mxu0 0
    %973 = vmatpush1.bf16.msra.mxu0 %v931
    %974 = vmatprep.subr.bf16.mxu0 0
    %975 = vmatpush1.bf16.msra.mxu0 %v932
    %976 = vmatprep.subr.bf16.mxu0 0
    %977 = vmatpush1.bf16.msra.mxu0 %v933
    %978 = vmatprep.subr.bf16.mxu0 0
    %979 = vmatpush1.bf16.msra.mxu0 %v934
    %980 = vmatprep.subr.bf16.mxu0 0
    %981 = vmatpush1.bf16.msra.mxu0 %v935
    %982 = vmatprep.subr.bf16.mxu0 0
    %983 = vmatpush1.bf16.msra.mxu0 %v936
    %984 = vmatprep.subr.bf16.mxu0 0
    %985 = vmatpush1.bf16.msra.mxu0 %v937
    %986 = vmatprep.mubr.bf16.mxu0 %v818
    %987 = vmatmul.mubr.bf16.gmra.mrb[0].mxu0 %v120
    %v988 = vpop.f32.mrb[0].mxu0
    %v989 = vadd.f32 %v856, %v988
    %v990 = vpop.f32.mrb[0].mxu0
    %v991 = vpop.f32.mrb[0].mxu0
    %v992 = vadd.f32 %v856, %v991
    %v993 = vpop.f32.mrb[0].mxu0
    %994 = vdwg.mxu0
    %v995 = vmul.f32 %v989, 0.5
    %v996 = vmul.f32 %v992, 0.5
    %v997 = vmul.f32 %v989, 0.044715
    %v998 = vmul.f32 %v992, 0.044715
    %v999 = vmul.f32 %v997, %v989
    %v1000 = vmul.f32 %v998, %v992
    %v1001 = vmul.f32 %v999, %v989
    %v1002 = vmul.f32 %v1000, %v992
    %v1003 = vadd.f32 %v989, %v1001
    %v1004 = vadd.f32 %v992, %v1002
    %v1005 = vmul.f32 %v1003, 0.7978846
    %v1006 = vmul.f32 %v1004, 0.7978846
    %v1007 = vtanh.pop %v1005
    %v1008 = vtanh.pop %v1006
    %v1009 = vadd.f32 %v1007, 1.0
    %v1010 = vadd.f32 %v1008, 1.0
    %v1011 = vmul.f32 %v995, %v1009
    %v1012 = vmul.f32 %v996, %v1010
    %v1013 = vpack.c.bf16 %v1012, %v1011
    %v1014 = vld [vmem:[#allocation10] sm:$0xf]
    %v1015 = vld [vmem:[#allocation10 + $0x4] sm:$0xf]
    %v1016 = vld [vmem:[#allocation10 + $0x8] sm:$0xf]
    %v1017 = vld [vmem:[#allocation10 + $0xc] sm:$0xf]
    %v1018 = vld [vmem:[#allocation10 + $0x10] sm:$0xf]
    %v1019 = vld [vmem:[#allocation10 + $0x14] sm:$0xf]
    %v1020 = vld [vmem:[#allocation10 + $0x18] sm:$0xf]
    %v1021 = vld [vmem:[#allocation10 + $0x1c] sm:$0xf]
    %v1022 = vld [vmem:[#allocation10 + $0x20] sm:$0xf]
    %v1023 = vld [vmem:[#allocation10 + $0x24] sm:$0xf]
    %v1024 = vld [vmem:[#allocation10 + $0x28] sm:$0xf]
    %v1025 = vld [vmem:[#allocation10 + $0x2c] sm:$0xf]
    %v1026 = vld [vmem:[#allocation10 + $0x30] sm:$0xf]
    %v1027 = vld [vmem:[#allocation10 + $0x34] sm:$0xf]
    %v1028 = vld [vmem:[#allocation10 + $0x38] sm:$0xf]
    %v1029 = vld [vmem:[#allocation10 + $0x3c] sm:$0xf]
    %v1030 = vld [vmem:[%s12] sm:$0x1]
    %v1032 = vlaneseq
    %v1033 = vshrl.u32 %v1032, 7
    %v1034 = vsub.s32 0, %v1033
    %v1035 = vrot.slane %v1030, %v1034
    %v1053 = vunpack.c.l.b16 %v1014
    %v1054 = vunpack.c.l.b16 %v1015
    %v1055 = vunpack.c.l.b16 %v1016
    %v1056 = vunpack.c.l.b16 %v1017
    %v1057 = vunpack.c.l.b16 %v1018
    %v1058 = vunpack.c.l.b16 %v1019
    %v1059 = vunpack.c.l.b16 %v1020
    %v1060 = vunpack.c.l.b16 %v1021
    %v1061 = vunpack.c.l.b16 %v1022
    %v1062 = vunpack.c.l.b16 %v1023
    %v1063 = vunpack.c.l.b16 %v1024
    %v1064 = vunpack.c.l.b16 %v1025
    %v1065 = vunpack.c.l.b16 %v1026
    %v1066 = vunpack.c.l.b16 %v1027
    %v1067 = vunpack.c.l.b16 %v1028
    %v1068 = vunpack.c.l.b16 %v1029
    %v1069 = vpack.c.b16 %v1054, %v1053
    %v1070 = vpack.c.b16 %v1056, %v1055
    %v1071 = vpack.c.b16 %v1058, %v1057
    %v1072 = vpack.c.b16 %v1060, %v1059
    %v1073 = vpack.c.b16 %v1062, %v1061
    %v1074 = vpack.c.b16 %v1064, %v1063
    %v1075 = vpack.c.b16 %v1066, %v1065
    %v1076 = vpack.c.b16 %v1068, %v1067
    %1085 = vmatprep.subr.bf16.mxu0 0
    %1086 = vmatpush1.bf16.msra.mxu0 %v1069
    %1087 = vmatprep.subr.bf16.mxu0 0
    %1088 = vmatpush1.bf16.msra.mxu0 %v1070
    %1089 = vmatprep.subr.bf16.mxu0 0
    %1090 = vmatpush1.bf16.msra.mxu0 %v1071
    %1091 = vmatprep.subr.bf16.mxu0 0
    %1092 = vmatpush1.bf16.msra.mxu0 %v1072
    %1093 = vmatprep.subr.bf16.mxu0 0
    %1094 = vmatpush1.bf16.msra.mxu0 %v1073
    %1095 = vmatprep.subr.bf16.mxu0 0
    %1096 = vmatpush1.bf16.msra.mxu0 %v1074
    %1097 = vmatprep.subr.bf16.mxu0 0
    %1098 = vmatpush1.bf16.msra.mxu0 %v1075
    %1099 = vmatprep.subr.bf16.mxu0 0
    %1100 = vmatpush1.bf16.msra.mxu0 %v1076
    %1101 = vmatprep.subr.bf16.mxu0 0
    %1102 = vmatpush1.bf16.msra.mxu0 0
    %1103 = vmatprep.subr.bf16.mxu0 0
    %1104 = vmatpush1.bf16.msra.mxu0 0
    %1105 = vmatprep.subr.bf16.mxu0 0
    %1106 = vmatpush1.bf16.msra.mxu0 0
    %1107 = vmatprep.subr.bf16.mxu0 0
    %1108 = vmatpush1.bf16.msra.mxu0 0
    %1109 = vmatprep.subr.bf16.mxu0 0
    %1110 = vmatpush1.bf16.msra.mxu0 0
    %1111 = vmatprep.subr.bf16.mxu0 0
    %1112 = vmatpush1.bf16.msra.mxu0 0
    %1113 = vmatprep.subr.bf16.mxu0 0
    %1114 = vmatpush1.bf16.msra.mxu0 0
    %1115 = vmatprep.subr.bf16.mxu0 0
    %1116 = vmatpush1.bf16.msra.mxu0 0
    %1117 = vmatprep.mubr.bf16.mxu0 0
    %1118 = vmatmul.mubr.bf16.gmra.mrb[0].mxu0 %v1013
    %v1119 = vpop.f32.mrb[0].mxu0
    %v1120 = vadd.f32 %v1035, %v1119
    %v1121 = vpop.f32.mrb[0].mxu0
    %v1122 = vpop.f32.mrb[0].mxu0
    %v1123 = vadd.f32 %v1035, %v1122
    %v1124 = vpop.f32.mrb[0].mxu0
    %1125 = vdwg.mxu0
    %v1126 = vmul.f32 %v1120, 0.5
    %v1127 = vmul.f32 %v1123, 0.5
    %v1128 = vmul.f32 %v1120, 0.044715
    %v1129 = vmul.f32 %v1123, 0.044715
    %v1130 = vmul.f32 %v1128, %v1120
    %v1131 = vmul.f32 %v1129, %v1123
    %v1132 = vmul.f32 %v1130, %v1120
    %v1133 = vmul.f32 %v1131, %v1123
    %v1134 = vadd.f32 %v1120, %v1132
    %v1135 = vadd.f32 %v1123, %v1133
    %v1136 = vmul.f32 %v1134, 0.7978846
    %v1137 = vmul.f32 %v1135, 0.7978846
    %v1138 = vtanh.pop %v1136
    %v1139 = vtanh.pop %v1137
    %v1140 = vadd.f32 %v1138, 1.0
    %v1141 = vadd.f32 %v1139, 1.0
    %v1142 = vmul.f32 %v1126, %v1140
    %v1143 = vmul.f32 %v1127, %v1141
    %v1144 = vadd.f32 %v1142, %v114
    %v1145 = vadd.f32 %v1143, %v115
    %1146 = vst [vmem:[#allocation11] sm:$0xff] %v1144
    %1147 = vst [vmem:[#allocation11 + $0x8] sm:$0xff] %v1145
    // Predicated region
    $region74: #{tpu_custom_call.1} parent=1 // pred_check
      _
    $region75: #{tpu_custom_call.1} parent=1 // pred_check_branch
      %1149 = sbr.rel (0) target = $region77
    $region76: #{tpu_custom_call.1} parent=1 // pred_region
      %s1151 = ssub.s32 256, 256
      %1152 = vsyncadd [#allocation4], %s1151
      %s1153 = sshll.u32 [#allocation11], 4
      %s1154 = int_to_ptr.vmem [resolvable:$true] %s1153
      %1159 = dma.vmem_to_hbm [thread:$0]  %s1154, 256, %s13, [#allocation4], 128, 128, 8
    $region77: #{tpu_custom_call.1} parent=1 // pred_fallthru
      _
    // Predicated region
    $region78: #{tpu_custom_call.1} parent=1 // pred_check
      _
    $region79: #{tpu_custom_call.1} parent=1 // pred_check_branch
      %1161 = sbr.rel (0) target = $region81
    $region80: #{tpu_custom_call.1} parent=1 // pred_region
      %1162 = dma.done [#allocation4], 256
    $region81: #{tpu_custom_call.1} parent=1 // pred_fallthru
      _
    %1163 = vsyncpa [#allocation3], 1
    %1164 = vsyncpa [#allocation6], 1
    %1165 = vsyncpa [#allocation9], 1
    %1166 = vsyncpa [#allocation4], 1

</llo_original>
